<compile_context>
chip_gen: v5e
topology: v5e:2x2
jax: 0.10.0
libtpu: 0.0.40
codegen_flags: <defaults>
</compile_context>

<pallas_src>
import numpy as np
import jax
import jax.numpy as jnp
from jax import lax
from jax.experimental import pallas as pl
from jax.experimental.pallas import tpu as pltpu

EPS = 1e-8
LANE = 128
SUBLANE = 8


def _round_up(x, m):
    return ((x + m - 1) // m) * m


def _make_kernel(row_tile, chunk_rows):
    ragged = (chunk_rows % row_tile) != 0

    def kernel(p_ref, t_ref, o_ref):
        # Grid = (batch*chunk, row-tiles).  The output block index depends only
        # on the first axis, so o_ref stays resident in VMEM across the
        # row-tile axis and acts as an (8, 128) f32 accumulator.
        r = pl.program_id(1)

        @pl.when(r == 0)
        def _():
            o_ref[...] = jnp.zeros_like(o_ref)

        # Stream native dtype; upcast per-tile BEFORE the subtraction so bf16
        # inputs keep full precision in (p - t). Pure VPU work, hidden by DMA.
        d = p_ref[...].astype(jnp.float32) - t_ref[...].astype(jnp.float32)

        if ragged:
            # Final row tile extends past the array: the tail of the VMEM
            # buffer holds unspecified data, so mask those rows to zero.
            row_idx = lax.broadcasted_iota(jnp.int32, d.shape, 0)
            d = jnp.where(row_idx < (chunk_rows - r * row_tile), d, 0.0)

        dd = d * d
        # Fold the tile onto vreg-shaped (8, 128) slabs and add them up:
        # a free relabeling reshape + sequential vector adds (no XLU work).
        o_ref[...] += jnp.sum(dd.reshape(-1, SUBLANE, LANE), axis=0)

    return kernel


def log_l2(predictions, target, *, row_tile=8192):
    """10 * mean_b(log10(sum (pred - target)^2 + EPS)) — matches LogL2.forward."""
    if predictions.ndim == 3:        # [sources, stereo, samples] -> batch of 1
        predictions = predictions[None]
        target = target[None]
    assert predictions.shape == target.shape
    B = predictions.shape[0]
    n = int(np.prod(predictions.shape[1:]))

    # Free relabel to (B, n) in the *native* dtype (no f32 copy in the wrapper).
    p = predictions.reshape(B, n)
    t = target.reshape(B, n)

    rows = pl.cdiv(n, LANE)
    rows8 = _round_up(rows, SUBLANE)
    pad_needed = rows8 * LANE != n

    # v7x has 2 TensorCores: with a single batch item the whole reduction would
    # run on one TC.  Split each batch's rows into 2 chunks (parallel grid axis)
    # but only when the split is free (already aligned, or a pad is unavoidable
    # anyway) so we never add an extra HBM pass just to split.
    if B == 1 and (rows % (2 * SUBLANE) == 0 or pad_needed):
        n_chunks = 2
        rows_al = _round_up(rows, n_chunks * SUBLANE)
    else:
        n_chunks = 1
        rows_al = rows8

    n_al = rows_al * LANE
    if n_al != n:
        # Zero padding contributes 0 to the squared-error sum (native dtype,
        # only up to one (8|16)x128 slab per batch — never a full row tile).
        p = jnp.pad(p, ((0, 0), (0, n_al - n)))
        t = jnp.pad(t, ((0, 0), (0, n_al - n)))

    chunk_rows = rows_al // n_chunks
    bc = B * n_chunks
    p = p.reshape(bc, chunk_rows, LANE)        # free relabel (contiguous)
    t = t.reshape(bc, chunk_rows, LANE)

    row_tile = min(row_tile, chunk_rows)       # chunk_rows is a multiple of 8
    num_tiles = pl.cdiv(chunk_rows, row_tile)

    partial = pl.pallas_call(
        _make_kernel(row_tile, chunk_rows),
        out_shape=jax.ShapeDtypeStruct((bc, SUBLANE, LANE), jnp.float32),
        grid_spec=pltpu.PrefetchScalarGridSpec(
            num_scalar_prefetch=0,
            grid=(bc, num_tiles),
            in_specs=[
                pl.BlockSpec((None, row_tile, LANE), lambda b, r: (b, r, 0)),
                pl.BlockSpec((None, row_tile, LANE), lambda b, r: (b, r, 0)),
            ],
            out_specs=pl.BlockSpec((None, SUBLANE, LANE), lambda b, r: (b, 0, 0)),
        ),
        compiler_params=pltpu.CompilerParams(
            # batch/chunk blocks are independent -> parallel (both v7x TCs);
            # the row-tile axis is the sequential reduction axis.
            dimension_semantics=("parallel", "arbitrary"),
            # 2 inputs x 2 pipeline buffers x (row_tile,128) + body temps;
            # 48 MiB is enough headroom and stays well under v7x's 64 MiB.
            vmem_limit_bytes=48 * 1024 * 1024,
        ),
    )(p, t)

    # Tiny epilogue in plain JAX: per-batch reduce of (n_chunks, 8, 128)
    # partials, log10, mean, scale.
    per_batch = jnp.sum(partial.reshape(B, -1), axis=1)        # (B,)
    return 10.0 * jnp.mean(jnp.log10(per_batch + EPS))


def _log_l2_ref(predictions, target):
    # Pure-JAX reference mirroring the PyTorch module.
    if predictions.ndim == 3:
        predictions = predictions[None]
        target = target[None]
    d2 = jnp.square(predictions.astype(jnp.float32) - target.astype(jnp.float32))
    s = jnp.sum(d2, axis=tuple(range(1, predictions.ndim)))
    return 10.0 * jnp.mean(jnp.log10(s + EPS))


if __name__ == "__main__":
    key = jax.random.PRNGKey(0)
    k1, k2, k3, k4 = jax.random.split(key, 4)

    # 4-D path: [batch, sources, stereo, samples]
    shape = (2, 2, 2, 2048)
    predictions = jax.random.normal(k1, shape, dtype=jnp.float32)
    target = jax.random.normal(k2, shape, dtype=jnp.float32)

    loss = log_l2(predictions, target)
    jax.block_until_ready(loss)
    ref = _log_l2_ref(predictions, target)
    np.testing.assert_allclose(np.asarray(loss), np.asarray(ref),
                               rtol=1e-4, atol=1e-4)

    # 3-D (single-item) path with a ragged length and bf16 inputs: exercises
    # the in-kernel upcast, native-dtype pad-to-lane tail, and 2-chunk split.
    shape3 = (2, 2, 1000)
    p3 = jax.random.normal(k3, shape3, dtype=jnp.bfloat16)
    t3 = jax.random.normal(k4, shape3, dtype=jnp.bfloat16)
    loss3 = log_l2(p3, t3)
    jax.block_until_ready(loss3)
    ref3 = _log_l2_ref(p3, t3)
    np.testing.assert_allclose(np.asarray(loss3), np.asarray(ref3),
                               rtol=1e-3, atol=1e-3)

    print("KERNEL_OK")
</pallas_src>

<mosaic_0001>
module attributes {stable_mosaic.version = 11 : i64} {
  func.func @kernel(%arg0: i32, %arg1: i32, %arg2: memref<1x64x128xf32, #tpu.memory_space<vmem>>, %arg3: memref<1x64x128xf32, #tpu.memory_space<vmem>>, %arg4: memref<1x8x128xf32, #tpu.memory_space<vmem>>) attributes {dimension_semantics = [#tpu.dimension_semantics<parallel>, #tpu.dimension_semantics<arbitrary>], iteration_bounds = array<i64: 2, 1>, scalar_prefetch = 0 : i64, scratch_operands = 0 : i64, tpu.core_type = #tpu.core_type<tc>, window_params = [{transform_indices = @transform_0, window_bounds = array<i64: 1, 64, 128>}, {transform_indices = @transform_1, window_bounds = array<i64: 1, 64, 128>}, {transform_indices = @transform_2, window_bounds = array<i64: 1, 8, 128>}]} {
    %c0_i32 = arith.constant 0 : i32
    %0 = arith.cmpi eq, %arg1, %c0_i32 : i32
    %1 = arith.extui %0 : i1 to i32
    %c0_i32_0 = arith.constant 0 : i32
    %2 = arith.cmpi ne, %1, %c0_i32_0 : i32
    scf.if %2 {
      %cst_12 = arith.constant 0.000000e+00 : f32
      %17 = vector.broadcast %cst_12 : f32 to vector<8x128xf32>
      %c0_13 = arith.constant 0 : index
      %c0_14 = arith.constant 0 : index
      %c0_15 = arith.constant 0 : index
      %18 = vector.load %arg4[%c0_13, %c0_14, %c0_15] : memref<1x8x128xf32, #tpu.memory_space<vmem>>, vector<1x8x128xf32>
      %19 = vector.shape_cast %18 : vector<1x8x128xf32> to vector<8x128xf32>
      %20 = vector.shape_cast %17 : vector<8x128xf32> to vector<1x8x128xf32>
      tpu.vector_store %arg4[%c0_13, %c0_14, %c0_15], %20 {strides = array<i32>} : memref<1x8x128xf32, #tpu.memory_space<vmem>>, vector<1x8x128xf32>,
    } else {
    }
    %c0 = arith.constant 0 : index
    %c0_1 = arith.constant 0 : index
    %c0_2 = arith.constant 0 : index
    %3 = vector.load %arg2[%c0, %c0_1, %c0_2] : memref<1x64x128xf32, #tpu.memory_space<vmem>>, vector<1x64x128xf32>
    %4 = vector.shape_cast %3 : vector<1x64x128xf32> to vector<64x128xf32>
    %c0_3 = arith.constant 0 : index
    %c0_4 = arith.constant 0 : index
    %c0_5 = arith.constant 0 : index
    %5 = vector.load %arg3[%c0_3, %c0_4, %c0_5] : memref<1x64x128xf32, #tpu.memory_space<vmem>>, vector<1x64x128xf32>
    %6 = vector.shape_cast %5 : vector<1x64x128xf32> to vector<64x128xf32>
    %7 = arith.subf %4, %6 : vector<64x128xf32>
    %8 = arith.mulf %7, %7 : vector<64x128xf32>
    %c0_6 = arith.constant 0 : index
    %c0_7 = arith.constant 0 : index
    %c0_8 = arith.constant 0 : index
    %9 = vector.load %arg4[%c0_6, %c0_7, %c0_8] : memref<1x8x128xf32, #tpu.memory_space<vmem>>, vector<1x8x128xf32>
    %10 = vector.shape_cast %9 : vector<1x8x128xf32> to vector<8x128xf32>
    %11 = vector.shape_cast %8 : vector<64x128xf32> to vector<8x8x128xf32>
    %cst = arith.constant dense<0.000000e+00> : vector<8x128xf32>
    %12 = vector.multi_reduction <add>, %11, %cst [0] : vector<8x8x128xf32> to vector<8x128xf32>
    %13 = arith.addf %10, %12 : vector<8x128xf32>
    %c0_9 = arith.constant 0 : index
    %c0_10 = arith.constant 0 : index
    %c0_11 = arith.constant 0 : index
    %14 = vector.load %arg4[%c0_9, %c0_10, %c0_11] : memref<1x8x128xf32, #tpu.memory_space<vmem>>, vector<1x8x128xf32>
    %15 = vector.shape_cast %14 : vector<1x8x128xf32> to vector<8x128xf32>
    %16 = vector.shape_cast %13 : vector<8x128xf32> to vector<1x8x128xf32>
    tpu.vector_store %arg4[%c0_9, %c0_10, %c0_11], %16 {strides = array<i32>} : memref<1x8x128xf32, #tpu.memory_space<vmem>>, vector<1x8x128xf32>,
    return
  }
  func.func @transform_0(%arg0: i32, %arg1: i32) -> (i32, i32, i32) {
    %c0_i32 = arith.constant 0 : i32
    %c0_i32_0 = arith.constant 0 : i32
    return %arg0, %arg1, %c0_i32 : i32, i32, i32
  }
  func.func @transform_1(%arg0: i32, %arg1: i32) -> (i32, i32, i32) {
    %c0_i32 = arith.constant 0 : i32
    %c0_i32_0 = arith.constant 0 : i32
    return %arg0, %arg1, %c0_i32 : i32, i32, i32
  }
  func.func @transform_2(%arg0: i32, %arg1: i32) -> (i32, i32, i32) {
    %c0_i32 = arith.constant 0 : i32
    %c0_i32_0 = arith.constant 0 : i32
    %c0_i32_1 = arith.constant 0 : i32
    return %arg0, %c0_i32, %c0_i32_0 : i32, i32, i32
  }
}

</mosaic_0001>

<llo_original>
// kernel: tpu_custom_call.1
$region0: #{tpu_custom_call.1}
  #allocation0 [shape = 'u32[]', space=smem, size = 0x4, offset = 0x4, fixed_abs, tag = 'smem constant byte address 0x4 - core index']
  #allocation1 [shape = 'u32[72,128]{1,0:T(1,128)}', space=vmem, size = 0x9000, scoped, tag = 'internal scratch']
  %s0 = inlined_call_operand.hbm [shape: f32[2,64,128], index: 0, kind: input, shape index: {}]
  %s1 = inlined_call_operand.hbm [shape: f32[2,64,128], index: 1, kind: input, shape index: {}]
  %s2 = inlined_call_operand.hbm [shape: f32[2,8,128], index: 2, kind: output, shape index: {}]
  %s3 = sld [smem:[#allocation0]]
  $region53: #{tpu_custom_call.1} parent=0
    _
  %s5 = ssub.s32 1, %s3
  %s6 = scalar_select 0, %s5, %s3
  $region1: #{tpu_custom_call.1} parent=0
    #allocation2 [shape = 'u8[65536]{0}', space=vmem, size = 0x10000, scoped, tag = 'input window, operand 0']
    #allocation3 [shape = 's32[2]{0}', space=sflag, size = 0x8, scoped, tag = 'scoped memory for tpu_custom_call.1']
    #allocation4 [shape = 's32[2]{0}', space=sflag, size = 0x8, scoped, tag = 'scoped memory for tpu_custom_call.1']
    #allocation5 [shape = 'u8[65536]{0}', space=vmem, size = 0x10000, scoped, tag = 'input window, operand 1']
    #allocation6 [shape = 's32[2]{0}', space=sflag, size = 0x8, scoped, tag = 'scoped memory for tpu_custom_call.1']
    #allocation7 [shape = 'u8[8192]{0}', space=vmem, size = 0x2000, scoped, tag = 'output window, operand 0']
    %7 = vsyncpa [#allocation3], 0
    %s8 = scalar_lea.sflag [#allocation3], 1
    %9 = vsyncpa %s8, 0
    %10 = vsyncpa [#allocation6], 0
    %s11 = scalar_lea.sflag [#allocation6], 1
    %12 = vsyncpa %s11, 0
    %13 = vsyncpa [#allocation4], 0
    %s14 = scalar_lea.sflag [#allocation4], 1
    %15 = vsyncpa %s14, 0
    loop: start=0, step=1, limit=4
    $region2: #{tpu_custom_call.1} parent=1 // loop_pre_header
      _
    $region3: #{tpu_custom_call.1} parent=1 // loop_header
      %s17 = sphi 0, %s21
      %p18 = scmp.ge.s32.totalorder %s17, 4
      %s24 = sphi 0, %s36
      %s25 = sphi 0, %s32
      %s26 = sphi 0, %s24
      %s27 = sphi 0, %s25
      %s28 = sphi 0, %s26
      %s29 = sphi 0, %s27
      %s41 = sphi 0, %s43
      %s44 = sphi 0, %s41
      %s45 = sphi 0, %s44
      %s61 = sphi 0, %s45
      %s69 = sphi 0, %s71
      %s72 = sphi 0, %s69
      %s73 = sphi 0, %s72
      %s89 = sphi 0, %s73
      %s95 = sphi 0, %s97
      %s98 = sphi 0, %s95
      %s99 = sphi 0, %s98
      %s115 = sphi 0, %s99
    $region4: #{tpu_custom_call.1} parent=1 // loop_header_branch
      %20 = sbr.rel (%p18) target = $region8
    $region5: #{tpu_custom_call.1} parent=1 // loop_body
      %s22 = ssub.s32 %s17, 1
      %s23 = ssub.s32 %s17, 2
      %s30 = sadd.s32 1, %s25
      %p31 = scmp.ge.s32.totalorder %s30, 1
      %s32 = scalar_select %p31, 0, %s30
      %s33 = sadd.s32 1, %s24
      %s34 = scalar_select %p31, %s33, %s24
      %p35 = scmp.ge.s32.totalorder %s34, 2
      %s36 = scalar_select %p35, 0, %s34
      %s37 = ssub.s32 %s24, %s36
      %s38 = ssub.s32 %s25, %s32
      %s39 = sor.u32 %s37, %s38
      %p40 = scmp.eq.s32.totalorder %s39, 0
      %s42 = sadd.s32 %s41, 1
      %s43 = scalar_select %p40, %s41, %s42
      %p46 = pneg %p40
      %p47 = scmp.eq.s32.totalorder %s17, 1
      %p48 = por %p46, %p47
      %p49 = scmp.ne.s32.totalorder %s41, %s44
      %p50 = scmp.eq.s32.totalorder %s17, 0
      %p51 = por %p49, %p50
      %p52 = scmp.ne.s32.totalorder %s41, %s44
      %p53 = scmp.eq.s32.totalorder %s22, 1
      %p54 = por %p52, %p53
      %p55 = scmp.ne.s32.totalorder %s44, %s45
      %p56 = scmp.eq.s32.totalorder %s22, 0
      %p57 = por %p55, %p56
      %p58 = scmp.ne.s32.totalorder %s44, %s45
      %p59 = scmp.eq.s32.totalorder %s23, 1
      %p60 = por %p58, %p59
      %p62 = scmp.ne.s32.totalorder %s45, %s61
      %p63 = scmp.eq.s32.totalorder %s23, 0
      %p64 = por %p62, %p63
      %s65 = ssub.s32 %s24, %s36
      %s66 = ssub.s32 %s25, %s32
      %s67 = sor.u32 %s65, %s66
      %p68 = scmp.eq.s32.totalorder %s67, 0
      %s70 = sadd.s32 %s69, 1
      %s71 = scalar_select %p68, %s69, %s70
      %p74 = pneg %p68
      %p75 = scmp.eq.s32.totalorder %s17, 1
      %p76 = por %p74, %p75
      %p77 = scmp.ne.s32.totalorder %s69, %s72
      %p78 = scmp.eq.s32.totalorder %s17, 0
      %p79 = por %p77, %p78
      %p80 = scmp.ne.s32.totalorder %s69, %s72
      %p81 = scmp.eq.s32.totalorder %s22, 1
      %p82 = por %p80, %p81
      %p83 = scmp.ne.s32.totalorder %s72, %s73
      %p84 = scmp.eq.s32.totalorder %s22, 0
      %p85 = por %p83, %p84
      %p86 = scmp.ne.s32.totalorder %s72, %s73
      %p87 = scmp.eq.s32.totalorder %s23, 1
      %p88 = por %p86, %p87
      %p90 = scmp.ne.s32.totalorder %s73, %s89
      %p91 = scmp.eq.s32.totalorder %s23, 0
      %p92 = por %p90, %p91
      %s93 = ssub.s32 %s24, %s36
      %p94 = scmp.eq.s32.totalorder %s93, 0
      %s96 = sadd.s32 %s95, 1
      %s97 = scalar_select %p94, %s95, %s96
      %p100 = pneg %p94
      %p101 = scmp.eq.s32.totalorder %s17, 1
      %p102 = por %p100, %p101
      %p103 = scmp.ne.s32.totalorder %s95, %s98
      %p104 = scmp.eq.s32.totalorder %s17, 0
      %p105 = por %p103, %p104
      %p106 = scmp.ne.s32.totalorder %s95, %s98
      %p107 = scmp.eq.s32.totalorder %s22, 1
      %p108 = por %p106, %p107
      %p109 = scmp.ne.s32.totalorder %s98, %s99
      %p110 = scmp.eq.s32.totalorder %s22, 0
      %p111 = por %p109, %p110
      %p112 = scmp.ne.s32.totalorder %s98, %s99
      %p113 = scmp.eq.s32.totalorder %s23, 1
      %p114 = por %p112, %p113
      %p116 = scmp.ne.s32.totalorder %s99, %s115
      %p117 = scmp.eq.s32.totalorder %s23, 0
      %p118 = por %p116, %p117
      %p119 = scmp.le.s32.totalorder 1, %s17
      %p120 = scmp.lt.s32.totalorder %s17, 3
      %p121 = pnand %p119, %p120
      %p122 = pneg %p121
      // Predicated region
      $region9: #{tpu_custom_call.1} parent=5 // pred_check
        _
      $region10: #{tpu_custom_call.1} parent=5 // pred_check_branch
        %124 = sbr.rel (%p121) target = $region12
      $region11: #{tpu_custom_call.1} parent=5 // pred_region
        %s125 = ssub.s32 %s17, 1
      $region12: #{tpu_custom_call.1} parent=5 // pred_fallthru
        _
      %p126 = scmp.lt.s32.totalorder %s17, 2
      // Predicated region
      $region13: #{tpu_custom_call.1} parent=5 // pred_check
        %p127 = pneg %p126
      $region14: #{tpu_custom_call.1} parent=5 // pred_check_branch
        %129 = sbr.rel (%p127) target = $region16
      $region15: #{tpu_custom_call.1} parent=5 // pred_region
        // Predicated region
        $region17: #{tpu_custom_call.1} parent=15 // pred_check
          %p130 = pneg %p51
        $region18: #{tpu_custom_call.1} parent=15 // pred_check_branch
          %132 = sbr.rel (%p130) target = $region20
        $region19: #{tpu_custom_call.1} parent=15 // pred_region
          %s133 = sand.u32 %s41, 1
          %s134 = scalar_lea.sflag [#allocation3], %s133
          %s135 = sand.u32 %s41, 1
          %s136 = smul.addr %s135, 64
          %s137 = scalar_lea.vmem [#allocation2], %s136
          %s138 = smul.u32 8, %s25
          %140 = vsyncadd %s134, 0
          %s141 = smul.addr %s24, 8
          %s142 = sadd.s32 %s138, %s141
          %s143 = smul.addr %s142, 8
          %s144 = scalar_lea.hbm %s0, %s143
          %s145 = sshll.u32 %s144, 4
          %s146 = int_to_ptr.hbm [resolvable:$true] %s145
          %s147 = sshll.u32 %s137, 4
          %s148 = int_to_ptr.vmem [resolvable:$true] %s147
          %153 = dma.hbm_to_vmem [thread:$0]  %s146, 1024, %s148, %s134, 128, 128, 8
        $region20: #{tpu_custom_call.1} parent=15 // pred_fallthru
          _
        // Predicated region
        $region21: #{tpu_custom_call.1} parent=15 // pred_check
          %p154 = pneg %p79
        $region22: #{tpu_custom_call.1} parent=15 // pred_check_branch
          %156 = sbr.rel (%p154) target = $region24
        $region23: #{tpu_custom_call.1} parent=15 // pred_region
          %s157 = sand.u32 %s69, 1
          %s158 = scalar_lea.sflag [#allocation6], %s157
          %s159 = sand.u32 %s69, 1
          %s160 = smul.addr %s159, 64
          %s161 = scalar_lea.vmem [#allocation5], %s160
          %s162 = smul.u32 8, %s25
          %164 = vsyncadd %s158, 0
          %s165 = smul.addr %s24, 8
          %s166 = sadd.s32 %s162, %s165
          %s167 = smul.addr %s166, 8
          %s168 = scalar_lea.hbm %s1, %s167
          %s169 = sshll.u32 %s168, 4
          %s170 = int_to_ptr.hbm [resolvable:$true] %s169
          %s171 = sshll.u32 %s161, 4
          %s172 = int_to_ptr.vmem [resolvable:$true] %s171
          %177 = dma.hbm_to_vmem [thread:$0]  %s170, 1024, %s172, %s158, 128, 128, 8
        $region24: #{tpu_custom_call.1} parent=15 // pred_fallthru
          _
      $region16: #{tpu_custom_call.1} parent=5 // pred_fallthru
        _
      %p178 = scmp.le.s32.totalorder 1, %s17
      %p179 = scmp.lt.s32.totalorder %s17, 3
      %p180 = pnand %p178, %p179
      %p181 = pneg %p180
      // Predicated region
      $region25: #{tpu_custom_call.1} parent=5 // pred_check
        _
      $region26: #{tpu_custom_call.1} parent=5 // pred_check_branch
        %183 = sbr.rel (%p180) target = $region28
      $region27: #{tpu_custom_call.1} parent=5 // pred_region
        %s184 = ssub.s32 %s17, 1
        %s185 = sand.u32 %s44, 1
        %s186 = scalar_lea.sflag [#allocation3], %s185
        %s187 = sand.u32 %s44, 1
        %s188 = smul.addr %s187, 64
        %s189 = scalar_lea.vmem [#allocation2], %s188
        // Predicated region
        $region29: #{tpu_custom_call.1} parent=27 // pred_check
          %p190 = pneg %p57
        $region30: #{tpu_custom_call.1} parent=27 // pred_check_branch
          %192 = sbr.rel (%p190) target = $region32
        $region31: #{tpu_custom_call.1} parent=27 // pred_region
          %194 = dma.done %s186, 1024
        $region32: #{tpu_custom_call.1} parent=27 // pred_fallthru
          _
        %s195 = sand.u32 %s72, 1
        %s196 = scalar_lea.sflag [#allocation6], %s195
        %s197 = sand.u32 %s72, 1
        %s198 = smul.addr %s197, 64
        %s199 = scalar_lea.vmem [#allocation5], %s198
        // Predicated region
        $region33: #{tpu_custom_call.1} parent=27 // pred_check
          %p200 = pneg %p85
        $region34: #{tpu_custom_call.1} parent=27 // pred_check_branch
          %202 = sbr.rel (%p200) target = $region36
        $region35: #{tpu_custom_call.1} parent=27 // pred_region
          %204 = dma.done %s196, 1024
        $region36: #{tpu_custom_call.1} parent=27 // pred_fallthru
          _
        %s205 = sand.u32 %s44, 1
        %s206 = scalar_lea.sflag [#allocation3], %s205
        %s207 = sand.u32 %s44, 1
        %s208 = smul.addr %s207, 64
        %s209 = scalar_lea.vmem [#allocation2], %s208
        %p210 = pneg %p57
        %p211 = pneg %p54
        %s212 = sand.u32 %s72, 1
        %s213 = scalar_lea.sflag [#allocation6], %s212
        %s214 = sand.u32 %s72, 1
        %s215 = smul.addr %s214, 64
        %s216 = scalar_lea.vmem [#allocation5], %s215
        %p217 = pneg %p85
        %p218 = pneg %p82
        %p219 = pneg %p111
        %p220 = pneg %p108
        %s221 = sand.u32 %s98, 1
        %s222 = scalar_lea.sflag [#allocation4], %s221
        %s223 = sand.u32 %s98, 1
        %s224 = smul.addr %s223, 8
        %s225 = scalar_lea.vmem [#allocation7], %s224
        %s226 = smul.u32 8, %s27
        %s227 = smul.u32 8, %s27
        %p228 = scmp.eq.s32.totalorder %s27, 0
        // Predicated region
        $region37: #{tpu_custom_call.1} parent=27 // pred_check
          %p229 = pneg %p228
        $region38: #{tpu_custom_call.1} parent=27 // pred_check_branch
          %231 = sbr.rel (%p229) target = $region40
        $region39: #{tpu_custom_call.1} parent=27 // pred_region
          %232 = vst [vmem:[%s225] sm:$0xff] 0.0
        $region40: #{tpu_custom_call.1} parent=27 // pred_fallthru
          _
        %v233 = vld [vmem:[%s189] sm:$0xff]
        %v234 = vld [vmem:[%s189 + $0x8] sm:$0xff]
        %v235 = vld [vmem:[%s189 + $0x10] sm:$0xff]
        %v236 = vld [vmem:[%s189 + $0x18] sm:$0xff]
        %v237 = vld [vmem:[%s189 + $0x20] sm:$0xff]
        %v238 = vld [vmem:[%s189 + $0x28] sm:$0xff]
        %v239 = vld [vmem:[%s189 + $0x30] sm:$0xff]
        %v240 = vld [vmem:[%s189 + $0x38] sm:$0xff]
        %v241 = vld [vmem:[%s199] sm:$0xff]
        %v242 = vld [vmem:[%s199 + $0x8] sm:$0xff]
        %v243 = vld [vmem:[%s199 + $0x10] sm:$0xff]
        %v244 = vld [vmem:[%s199 + $0x18] sm:$0xff]
        %v245 = vld [vmem:[%s199 + $0x20] sm:$0xff]
        %v246 = vld [vmem:[%s199 + $0x28] sm:$0xff]
        %v247 = vld [vmem:[%s199 + $0x30] sm:$0xff]
        %v248 = vld [vmem:[%s199 + $0x38] sm:$0xff]
        %v249 = vsub.f32 %v233, %v241
        %v250 = vsub.f32 %v234, %v242
        %v251 = vsub.f32 %v235, %v243
        %v252 = vsub.f32 %v236, %v244
        %v253 = vsub.f32 %v237, %v245
        %v254 = vsub.f32 %v238, %v246
        %v255 = vsub.f32 %v239, %v247
        %v256 = vsub.f32 %v240, %v248
        %v257 = vmul.f32 %v249, %v249
        %v258 = vmul.f32 %v250, %v250
        %v259 = vmul.f32 %v251, %v251
        %v260 = vmul.f32 %v252, %v252
        %v261 = vmul.f32 %v253, %v253
        %v262 = vmul.f32 %v254, %v254
        %v263 = vmul.f32 %v255, %v255
        %v264 = vmul.f32 %v256, %v256
        %v265 = vld [vmem:[%s225] sm:$0xff]
        %v266 = vadd.f32 %v257, %v258
        %v267 = vadd.f32 %v266, %v259
        %v268 = vadd.f32 %v267, %v260
        %v269 = vadd.f32 %v268, %v261
        %v270 = vadd.f32 %v269, %v262
        %v271 = vadd.f32 %v270, %v263
        %v272 = vadd.f32 %v271, %v264
        %v273 = vadd.f32 %v265, %v272
        %274 = vst [vmem:[%s225] sm:$0xff] %v273
        %s275 = sand.u32 %s98, 1
        %s276 = scalar_lea.sflag [#allocation4], %s275
        %s277 = sand.u32 %s98, 1
        %s278 = smul.addr %s277, 8
        %s279 = scalar_lea.vmem [#allocation7], %s278
        // Predicated region
        $region41: #{tpu_custom_call.1} parent=27 // pred_check
          %p280 = pneg %p108
        $region42: #{tpu_custom_call.1} parent=27 // pred_check_branch
          %282 = sbr.rel (%p280) target = $region44
        $region43: #{tpu_custom_call.1} parent=27 // pred_region
          %284 = vsyncadd %s276, 0
          %s285 = smul.addr %s26, 8
          %s286 = scalar_lea.hbm %s2, %s285
          %s288 = sshll.u32 %s279, 4
          %s289 = int_to_ptr.vmem [resolvable:$true] %s288
          %s290 = sshll.u32 %s286, 4
          %s291 = int_to_ptr.hbm [resolvable:$true] %s290
          %293 = dma.vmem_to_hbm [thread:$0]  %s289, 128, %s291, %s276
        $region44: #{tpu_custom_call.1} parent=27 // pred_fallthru
          _
      $region28: #{tpu_custom_call.1} parent=5 // pred_fallthru
        _
      %p294 = scmp.le.s32.totalorder 2, %s17
      // Predicated region
      $region45: #{tpu_custom_call.1} parent=5 // pred_check
        %p295 = pneg %p294
      $region46: #{tpu_custom_call.1} parent=5 // pred_check_branch
        %297 = sbr.rel (%p295) target = $region48
      $region47: #{tpu_custom_call.1} parent=5 // pred_region
        %s298 = ssub.s32 %s17, 2
        // Predicated region
        $region49: #{tpu_custom_call.1} parent=47 // pred_check
          %p299 = pneg %p114
        $region50: #{tpu_custom_call.1} parent=47 // pred_check_branch
          %301 = sbr.rel (%p299) target = $region52
        $region51: #{tpu_custom_call.1} parent=47 // pred_region
          %s302 = sand.u32 %s99, 1
          %s303 = scalar_lea.sflag [#allocation4], %s302
          %s304 = sand.u32 %s99, 1
          %s305 = smul.addr %s304, 8
          %s306 = scalar_lea.vmem [#allocation7], %s305
          %308 = dma.done %s303, 128
        $region52: #{tpu_custom_call.1} parent=47 // pred_fallthru
          _
      $region48: #{tpu_custom_call.1} parent=5 // pred_fallthru
        _
    $region6: #{tpu_custom_call.1} parent=1 // loop_footer
      %s21 = sadd.s32 1, %s17
    $region7: #{tpu_custom_call.1} parent=1 // loop_footer_branch
      %16 = sbr.rel target = $region3
    $region8: #{tpu_custom_call.1} parent=1 // loop_exit
      _
    %309 = vsyncpa [#allocation3], 1
    %s310 = scalar_lea.sflag [#allocation3], 1
    %311 = vsyncpa %s310, 1
    %312 = vsyncpa [#allocation6], 1
    %s313 = scalar_lea.sflag [#allocation6], 1
    %314 = vsyncpa %s313, 1
    %315 = vsyncpa [#allocation4], 1
    %s316 = scalar_lea.sflag [#allocation4], 1
    %317 = vsyncpa %s316, 1

</llo_original>
